<compile_context>
chip_gen: v7x
topology: tpu7x:2x2x1
jax: 0.10.0
libtpu: 0.0.40
codegen_flags: <defaults>
</compile_context>

<pallas_src>
import functools

import jax
import jax.numpy as jnp
from jax.experimental import pallas as pl
from jax.experimental.pallas import tpu as pltpu

LANE = 128  # padded lane width used for the hidden / output feature dims

# Packed-parameter slab layout (all row offsets are multiples of 8, so every
# static slice below is sublane-tile aligned):
_W1_OFF = 0      # rows [  0, 128) : W1  (in_features x hid, zero-padded)
_B1_OFF = 128    # row   128       : b1  (1 x hid, zero-padded)
_W2_OFF = 136    # rows [136, 264) : W2  (hid x out, zero-padded)
_B2_OFF = 264    # row   264       : b2  (1 x out, zero-padded)
_P_ROWS = 272


def _round_up(n, m):
    return ((n + m - 1) // m) * m


def _qnet_kernel(x_ref, p_ref, o_ref, *, in_f):
    # Static slices of the resident packed parameter slab (no data movement).
    w1 = p_ref[_W1_OFF:_W1_OFF + in_f, :]     # (in_f, 128)
    b1 = p_ref[_B1_OFF:_B1_OFF + 1, :]        # (1, 128)
    w2 = p_ref[_W2_OFF:_W2_OFF + LANE, :]     # (128, 128)
    b2 = p_ref[_B2_OFF:_B2_OFF + 1, :]        # (1, 128)

    # h = relu(x @ W1 + b1): contract directly over the in_f "real" rows of
    # W1 (Mosaic masks the unaligned contraction dim), f32 MXU accumulation.
    h = jnp.dot(x_ref[...], w1, preferred_element_type=jnp.float32)
    h = jnp.maximum(h + b1, 0.0)
    # out = h @ W2 + b2 (no activation on the output layer).  Padded hidden
    # lanes of h are exactly zero (zero W1 columns + zero b1 + ReLU), so the
    # full 128-row W2 contraction is mathematically identical to the module.
    out = jnp.dot(h, w2, preferred_element_type=jnp.float32) + b2
    o_ref[...] = out.astype(o_ref.dtype)


def pack_linear_qnet_params(w1, b1, w2, b2, input_size, hidden_size,
                            output_size, dtype=jnp.float32):
    """Pack params into one zero-padded (272, 128) slab.

    Weights must be pre-transposed to (in_features, out_features) layout, i.e.
    the kernel computes x @ W + b (PyTorch nn.Linear stores (out, in) and does
    x @ W.T + b).  Shapes are validated against the declared sizes so a raw
    PyTorch-layout weight can't silently produce wrong results.
    """
    if w1.shape != (input_size, hidden_size):
        raise ValueError(f"w1 must be (in, hid)=({input_size},{hidden_size}), "
                         f"got {w1.shape} (did you forget to transpose?)")
    if b1.shape != (hidden_size,):
        raise ValueError(f"b1 must be ({hidden_size},), got {b1.shape}")
    if w2.shape != (hidden_size, output_size):
        raise ValueError(f"w2 must be (hid, out)=({hidden_size},{output_size}), "
                         f"got {w2.shape} (did you forget to transpose?)")
    if b2.shape != (output_size,):
        raise ValueError(f"b2 must be ({output_size},), got {b2.shape}")
    if not (input_size <= LANE and hidden_size <= LANE and output_size <= LANE):
        raise ValueError("this packing assumes all feature dims fit in 128 lanes")

    p = jnp.zeros((_P_ROWS, LANE), dtype)
    p = p.at[_W1_OFF:_W1_OFF + input_size, :hidden_size].set(w1.astype(dtype))
    p = p.at[_B1_OFF, :hidden_size].set(b1.astype(dtype))
    p = p.at[_W2_OFF:_W2_OFF + hidden_size, :output_size].set(w2.astype(dtype))
    p = p.at[_B2_OFF, :output_size].set(b2.astype(dtype))
    return p


def linear_qnet_forward(x, packed_params, out_features, *, block_b=1024,
                        min_pallas_batch=16):
    """x: (B, input_size) f32; packed_params: (272, 128) slab from
    pack_linear_qnet_params.  Returns (B, out_features)."""
    B, in_f = x.shape
    assert in_f <= LANE and out_features <= LANE
    dtype = x.dtype

    # Tiny-batch (single game-step) path: pallas_call fixed overhead dominates,
    # a plain fused XLA expression is faster on every TPU generation.
    if B < min_pallas_batch:
        h = jnp.maximum(x @ packed_params[:in_f, :] + packed_params[_B1_OFF],
                        0.0)
        out = h @ packed_params[_W2_OFF:_W2_OFF + LANE, :] + packed_params[_B2_OFF]
        return out[:, :out_features]

    # Batch tile: big enough to amortize the ~0.35 us per-step overhead, but
    # forced to give >= 2 grid steps so ("parallel",) shards the batch across
    # both v7x TensorCores.  Cap at 2048 rows -> double-buffered x/out blocks
    # stay ~4 MiB, far under the v5e 16 MiB scoped-VMEM default.
    block_b = min(block_b, 2048)
    tb = min(block_b, _round_up(pl.cdiv(B, 2), 8))
    tb = _round_up(max(tb, 8), 8)
    grid = (pl.cdiv(B, tb),)

    flops = int(2 * B * (in_f * LANE + LANE * LANE))
    bytes_accessed = int((B * in_f + _P_ROWS * LANE + B * LANE) * 4)

    out_pad = pl.pallas_call(
        functools.partial(_qnet_kernel, in_f=in_f),
        out_shape=jax.ShapeDtypeStruct((B, LANE), dtype),
        grid=grid,
        in_specs=[
            # x at its natural shape: tiled over batch, full (contiguous) rows.
            pl.BlockSpec((tb, in_f), lambda i: (i, 0)),
            # packed params: one block, resident across the whole grid.
            pl.BlockSpec((_P_ROWS, LANE), lambda i: (0, 0)),
        ],
        # Keep the output block 128 lanes wide (lane-dense unmasked vst).
        out_specs=pl.BlockSpec((tb, LANE), lambda i: (i, 0)),
        compiler_params=pltpu.CompilerParams(
            dimension_semantics=("parallel",)),   # v7x 2-TC batch sharding
        cost_estimate=pl.CostEstimate(
            flops=flops, transcendentals=0, bytes_accessed=bytes_accessed),
    )(x, packed_params)

    # Drop the padded output lanes (the only remaining wrapper-side op).
    return out_pad[:, :out_features]


def init_linear_qnet_params(key, input_size, hidden_size, output_size,
                            dtype=jnp.float32):
    """Deterministic init matching nn.Linear's U(-1/sqrt(fan_in), 1/sqrt(fan_in)).
    Weights are stored pre-transposed: (in_features, out_features)."""
    k1, k2, k3, k4 = jax.random.split(key, 4)
    bound1 = 1.0 / (input_size ** 0.5)
    bound2 = 1.0 / (hidden_size ** 0.5)
    w1 = jax.random.uniform(k1, (input_size, hidden_size), dtype,
                            minval=-bound1, maxval=bound1)
    b1 = jax.random.uniform(k2, (hidden_size,), dtype,
                            minval=-bound1, maxval=bound1)
    w2 = jax.random.uniform(k3, (hidden_size, output_size), dtype,
                            minval=-bound2, maxval=bound2)
    b2 = jax.random.uniform(k4, (output_size,), dtype,
                            minval=-bound2, maxval=bound2)
    return w1, b1, w2, b2


if __name__ == "__main__":
    # Snake-RL sizes: input=11 (state vec), hidden=32, out=3 actions.
    # Replay-buffer-sized batch: with the 2-step tiling rule this gives
    # grid=(2,) (128-row tiles), double-buffered x/out DMAs and both v7x TCs.
    input_size, hidden_size, output_size = 11, 32, 3
    batch = 256

    key = jax.random.PRNGKey(0)
    kx, kp = jax.random.split(key)
    x = jax.random.normal(kx, (batch, input_size), jnp.float32)
    w1, b1, w2, b2 = init_linear_qnet_params(kp, input_size, hidden_size,
                                             output_size)
    params = pack_linear_qnet_params(w1, b1, w2, b2,
                                     input_size, hidden_size, output_size)

    # Pure-JAX reference (same semantics as the PyTorch forward).
    ref = jnp.maximum(x @ w1 + b1, 0.0) @ w2 + b2

    # 1) Training-sized batch through the Pallas kernel (grid=(2,)).
    out = jax.block_until_ready(linear_qnet_forward(x, params, output_size))
    assert out.shape == (batch, output_size)
    assert jnp.allclose(out, ref, atol=1e-5, rtol=1e-5)

    # 2) Small, non-tile-multiple batch forced through the kernel to exercise
    #    the ragged boundary-block path (reads past B discarded on writeback).
    out_small = jax.block_until_ready(
        linear_qnet_forward(x[:5], params, output_size, min_pallas_batch=1))
    assert jnp.allclose(out_small, ref[:5], atol=1e-5, rtol=1e-5)

    # 3) Single game-step inference: fused jnp fast path (no pallas_call).
    out_one = jax.block_until_ready(
        linear_qnet_forward(x[:1], params, output_size))
    assert jnp.allclose(out_one, ref[:1], atol=1e-5, rtol=1e-5)

    # TODO(synk): Linear_QNet.save() (torch.save checkpoint I/O) has no kernel
    # equivalent and is intentionally not implemented.
    print("KERNEL_OK")
</pallas_src>

<mosaic_0001>
module attributes {stable_mosaic.version = 11 : i64} {
  func.func @_qnet_kernel(%arg0: i32, %arg1: memref<128x11xf32, #tpu.memory_space<vmem>>, %arg2: memref<272x128xf32, #tpu.memory_space<vmem>>, %arg3: memref<128x128xf32, #tpu.memory_space<vmem>>) attributes {dimension_semantics = [#tpu.dimension_semantics<parallel>], iteration_bounds = array<i64: 2>, scalar_prefetch = 0 : i64, scratch_operands = 0 : i64, tpu.core_type = #tpu.core_type<tc>, window_params = [{transform_indices = @transform_0, window_bounds = array<i64: 128, 11>}, {pipeline_mode = #tpu.pipeline_mode<synchronous>, transform_indices = @transform_1, window_bounds = array<i64: 272, 128>}, {transform_indices = @transform_2, window_bounds = array<i64: 128, 128>}]} {
    %c0 = arith.constant 0 : index
    %c0_0 = arith.constant 0 : index
    %0 = vector.load %arg2[%c0, %c0_0] : memref<272x128xf32, #tpu.memory_space<vmem>>, vector<11x128xf32>
    %c128 = arith.constant 128 : index
    %c0_1 = arith.constant 0 : index
    %1 = vector.load %arg2[%c128, %c0_1] : memref<272x128xf32, #tpu.memory_space<vmem>>, vector<1x128xf32>
    %c136 = arith.constant 136 : index
    %c0_2 = arith.constant 0 : index
    %2 = vector.load %arg2[%c136, %c0_2] : memref<272x128xf32, #tpu.memory_space<vmem>>, vector<128x128xf32>
    %c264 = arith.constant 264 : index
    %c0_3 = arith.constant 0 : index
    %3 = vector.load %arg2[%c264, %c0_3] : memref<272x128xf32, #tpu.memory_space<vmem>>, vector<1x128xf32>
    %c0_4 = arith.constant 0 : index
    %c0_5 = arith.constant 0 : index
    %4 = vector.load %arg1[%c0_4, %c0_5] : memref<128x11xf32, #tpu.memory_space<vmem>>, vector<128x11xf32>
    %cst = arith.constant dense<0.000000e+00> : vector<128x128xf32>
    %5 = tpu.matmul %4, %0, %cst {dimension_numbers = #tpu.dot_dimension_numbers<[1], [0], [0], [1], [0, 0, 1, 1], [], []>} : vector<128x11xf32>, vector<11x128xf32>, vector<128x128xf32> -> vector<128x128xf32>
    %6 = vector.broadcast %1 : vector<1x128xf32> to vector<128x128xf32>
    %7 = arith.addf %5, %6 : vector<128x128xf32>
    %cst_6 = arith.constant 0.000000e+00 : f32
    %8 = vector.broadcast %cst_6 : f32 to vector<128x128xf32>
    %9 = arith.maximumf %7, %8 : vector<128x128xf32>
    %cst_7 = arith.constant dense<0.000000e+00> : vector<128x128xf32>
    %10 = tpu.matmul %9, %2, %cst_7 {dimension_numbers = #tpu.dot_dimension_numbers<[1], [0], [0], [1], [0, 0, 1, 1], [], []>} : vector<128x128xf32>, vector<128x128xf32>, vector<128x128xf32> -> vector<128x128xf32>
    %11 = vector.broadcast %3 : vector<1x128xf32> to vector<128x128xf32>
    %12 = arith.addf %10, %11 : vector<128x128xf32>
    %c0_8 = arith.constant 0 : index
    %c0_9 = arith.constant 0 : index
    %13 = vector.load %arg3[%c0_8, %c0_9] : memref<128x128xf32, #tpu.memory_space<vmem>>, vector<128x128xf32>
    tpu.vector_store %arg3[%c0_8, %c0_9], %12 {strides = array<i32>} : memref<128x128xf32, #tpu.memory_space<vmem>>, vector<128x128xf32>,
    return
  }
  func.func @transform_0(%arg0: i32) -> (i32, i32) {
    %c0_i32 = arith.constant 0 : i32
    %c0_i32_0 = arith.constant 0 : i32
    return %arg0, %c0_i32 : i32, i32
  }
  func.func @transform_1(%arg0: i32) -> (i32, i32) {
    %c0_i32 = arith.constant 0 : i32
    %c0_i32_0 = arith.constant 0 : i32
    %c0_i32_1 = arith.constant 0 : i32
    return %c0_i32, %c0_i32_0 : i32, i32
  }
  func.func @transform_2(%arg0: i32) -> (i32, i32) {
    %c0_i32 = arith.constant 0 : i32
    %c0_i32_0 = arith.constant 0 : i32
    return %arg0, %c0_i32 : i32, i32
  }
}

</mosaic_0001>

<llo_original>
// kernel: tpu_custom_call.1
$region0: #{tpu_custom_call.1}
  #allocation0 [shape = 'u32[]', space=smem, size = 0x4, offset = 0x4, fixed_abs, tag = 'smem constant byte address 0x4 - core index']
  #allocation1 [shape = 'u32[144,128]{1,0:T(1,128)}', space=vmem, size = 0x12000, scoped, tag = 'internal scratch']
  %s0 = inlined_call_operand.vmem [shape: f32[256,11], index: 0, kind: input, shape index: {}]
  %s1 = inlined_call_operand.vmem [shape: f32[272,128], index: 1, kind: input, shape index: {}]
  %s2 = inlined_call_operand.hbm [shape: f32[256,128], index: 2, kind: output, shape index: {}]
  %s3 = sld [smem:[#allocation0]]
  $region41: #{tpu_custom_call.1} parent=0
    _
  %s5 = ssub.s32 1, %s3
  %s6 = scalar_select 0, %s5, %s3
  $region1: #{tpu_custom_call.1} parent=0
    #allocation2 [shape = 'u8[131072]{0}', space=vmem, size = 0x20000, scoped, tag = 'output window, operand 0']
    #allocation3 [shape = 's32[2]{0}', space=sflag, size = 0x8, scoped, tag = 'scoped memory for tpu_custom_call.1']
    %7 = vsyncpa [#allocation3], 0
    %s8 = scalar_lea.sflag [#allocation3], 1
    %9 = vsyncpa %s8, 0
    loop: start=0, step=1, limit=4
    $region2: #{tpu_custom_call.1} parent=1 // loop_pre_header
      _
    $region3: #{tpu_custom_call.1} parent=1 // loop_header
      %s11 = sphi 0, %s15
      %p12 = scmp.ge.s32.totalorder %s11, 4
      %s21 = sphi 0, %s23
      %s24 = sphi 0, %s21
      %s25 = sphi 0, %s24
      %s41 = sphi 0, %s25
      %s45 = sphi 0, %s45
      %s47 = sphi 0, %s45
      %s48 = sphi 0, %s47
      %s62 = sphi 0, %s48
      %s68 = sphi 0, %s70
      %s71 = sphi 0, %s68
      %s72 = sphi 0, %s71
      %s88 = sphi 0, %s72
    $region4: #{tpu_custom_call.1} parent=1 // loop_header_branch
      %14 = sbr.rel (%p12) target = $region8
    $region5: #{tpu_custom_call.1} parent=1 // loop_body
      %s16 = ssub.s32 %s11, 1
      %s17 = ssub.s32 %s11, 2
      %s18 = sadd.s32 %s11, 1
      %s19 = ssub.s32 %s11, %s18
      %p20 = scmp.eq.s32.totalorder %s19, 0
      %s22 = sadd.s32 %s21, 1
      %s23 = scalar_select %p20, %s21, %s22
      %p26 = pneg %p20
      %p27 = scmp.eq.s32.totalorder %s11, 1
      %p28 = por %p26, %p27
      %p29 = scmp.ne.s32.totalorder %s21, %s24
      %p30 = scmp.eq.s32.totalorder %s11, 0
      %p31 = por %p29, %p30
      %p32 = scmp.ne.s32.totalorder %s21, %s24
      %p33 = scmp.eq.s32.totalorder %s16, 1
      %p34 = por %p32, %p33
      %p35 = scmp.ne.s32.totalorder %s24, %s25
      %p36 = scmp.eq.s32.totalorder %s16, 0
      %p37 = por %p35, %p36
      %p38 = scmp.ne.s32.totalorder %s24, %s25
      %p39 = scmp.eq.s32.totalorder %s17, 1
      %p40 = por %p38, %p39
      %p42 = scmp.ne.s32.totalorder %s25, %s41
      %p43 = scmp.eq.s32.totalorder %s17, 0
      %p44 = por %p42, %p43
      %s46 = sadd.s32 %s45, 1
      %p49 = scmp.eq.s32.totalorder %s11, 1
      %p50 = scmp.ne.s32.totalorder %s45, %s47
      %p51 = scmp.eq.s32.totalorder %s11, 0
      %p52 = por %p50, %p51
      %p53 = scmp.ne.s32.totalorder %s45, %s47
      %p54 = scmp.eq.s32.totalorder %s16, 1
      %p55 = por %p53, %p54
      %p56 = scmp.ne.s32.totalorder %s47, %s48
      %p57 = scmp.eq.s32.totalorder %s16, 0
      %p58 = por %p56, %p57
      %p59 = scmp.ne.s32.totalorder %s47, %s48
      %p60 = scmp.eq.s32.totalorder %s17, 1
      %p61 = por %p59, %p60
      %p63 = scmp.ne.s32.totalorder %s48, %s62
      %p64 = scmp.eq.s32.totalorder %s17, 0
      %p65 = por %p63, %p64
      %s66 = ssub.s32 %s11, %s18
      %p67 = scmp.eq.s32.totalorder %s66, 0
      %s69 = sadd.s32 %s68, 1
      %s70 = scalar_select %p67, %s68, %s69
      %p73 = pneg %p67
      %p74 = scmp.eq.s32.totalorder %s11, 1
      %p75 = por %p73, %p74
      %p76 = scmp.ne.s32.totalorder %s68, %s71
      %p77 = scmp.eq.s32.totalorder %s11, 0
      %p78 = por %p76, %p77
      %p79 = scmp.ne.s32.totalorder %s68, %s71
      %p80 = scmp.eq.s32.totalorder %s16, 1
      %p81 = por %p79, %p80
      %p82 = scmp.ne.s32.totalorder %s71, %s72
      %p83 = scmp.eq.s32.totalorder %s16, 0
      %p84 = por %p82, %p83
      %p85 = scmp.ne.s32.totalorder %s71, %s72
      %p86 = scmp.eq.s32.totalorder %s17, 1
      %p87 = por %p85, %p86
      %p89 = scmp.ne.s32.totalorder %s72, %s88
      %p90 = scmp.eq.s32.totalorder %s17, 0
      %p91 = por %p89, %p90
      %p92 = scmp.le.s32.totalorder 1, %s11
      %p93 = scmp.lt.s32.totalorder %s11, 3
      %p94 = pnand %p92, %p93
      %p95 = pneg %p94
      // Predicated region
      $region9: #{tpu_custom_call.1} parent=5 // pred_check
        _
      $region10: #{tpu_custom_call.1} parent=5 // pred_check_branch
        %97 = sbr.rel (%p94) target = $region12
      $region11: #{tpu_custom_call.1} parent=5 // pred_region
        %s98 = ssub.s32 %s11, 1
        // Predicated region
        $region13: #{tpu_custom_call.1} parent=11 // pred_check
          %p99 = pneg %p58
        $region14: #{tpu_custom_call.1} parent=11 // pred_check_branch
          %101 = sbr.rel (%p99) target = $region16
        $region15: #{tpu_custom_call.1} parent=11 // pred_region
          _
        $region16: #{tpu_custom_call.1} parent=11 // pred_fallthru
          _
      $region12: #{tpu_custom_call.1} parent=5 // pred_fallthru
        _
      %p102 = scmp.lt.s32.totalorder %s11, 2
      // Predicated region
      $region17: #{tpu_custom_call.1} parent=5 // pred_check
        %p103 = pneg %p102
      $region18: #{tpu_custom_call.1} parent=5 // pred_check_branch
        %105 = sbr.rel (%p103) target = $region20
      $region19: #{tpu_custom_call.1} parent=5 // pred_region
        // Predicated region
        $region21: #{tpu_custom_call.1} parent=19 // pred_check
          %p106 = pneg %p31
        $region22: #{tpu_custom_call.1} parent=19 // pred_check_branch
          %108 = sbr.rel (%p106) target = $region24
        $region23: #{tpu_custom_call.1} parent=19 // pred_region
          %s109 = smul.u32 16, %s11
          %p110 = scmp.lt.s32.totalorder %s109, 31
          %s111 = scalar_select %p110, %s109, 31
          %s112 = smul.addr %s111, 8
          %s113 = scalar_lea.vmem %s0, %s112
          %s114 = smul.u32 16, %s11
        $region24: #{tpu_custom_call.1} parent=19 // pred_fallthru
          _
      $region20: #{tpu_custom_call.1} parent=5 // pred_fallthru
        _
      %p115 = scmp.le.s32.totalorder 1, %s11
      %p116 = scmp.lt.s32.totalorder %s11, 3
      %p117 = pnand %p115, %p116
      %p118 = pneg %p117
      // Predicated region
      $region25: #{tpu_custom_call.1} parent=5 // pred_check
        _
      $region26: #{tpu_custom_call.1} parent=5 // pred_check_branch
        %120 = sbr.rel (%p117) target = $region28
      $region27: #{tpu_custom_call.1} parent=5 // pred_region
        %s121 = ssub.s32 %s11, 1
        %s122 = smul.u32 16, %s16
        %p123 = scmp.lt.s32.totalorder %s122, 31
        %s124 = scalar_select %p123, %s122, 31
        %s125 = smul.addr %s124, 8
        %s126 = scalar_lea.vmem %s0, %s125
        %p127 = pneg %p37
        %p128 = pneg %p34
        %p129 = pneg %p58
        %p130 = pneg %p55
        %p131 = pneg %p84
        %p132 = pneg %p81
        %s133 = sand.u32 %s71, 1
        %s134 = scalar_lea.sflag [#allocation3], %s133
        %s135 = sand.u32 %s71, 1
        %s136 = smul.addr %s135, 128
        %s137 = scalar_lea.vmem [#allocation2], %s136
        %s138 = smul.u32 16, %s16
        %p139 = scmp.lt.s32.totalorder %s138, 31
        %s140 = scalar_select %p139, %s138, 31
        %s141 = smul.addr %s140, 8
        %s142 = scalar_lea.vmem %s0, %s141
        %s143 = smul.u32 16, %s16
        %s144 = smul.u32 16, %s16
        %v145 = vld [vmem:[%s1] sm:$0xff]
        %v146 = vld [vmem:[%s1 + $0x8] sm:$0x7]
        %v147 = vld [vmem:[%s1 + $0x80] sm:$0x1]
        %v148 = vld [vmem:[%s1 + $0x88] sm:$0xff]
        %v149 = vld [vmem:[%s1 + $0x90] sm:$0xff]
        %v150 = vld [vmem:[%s1 + $0x98] sm:$0xff]
        %v151 = vld [vmem:[%s1 + $0xa0] sm:$0xff]
        %v152 = vld [vmem:[%s1 + $0xa8] sm:$0xff]
        %v153 = vld [vmem:[%s1 + $0xb0] sm:$0xff]
        %v154 = vld [vmem:[%s1 + $0xb8] sm:$0xff]
        %v155 = vld [vmem:[%s1 + $0xc0] sm:$0xff]
        %v156 = vld [vmem:[%s1 + $0xc8] sm:$0xff]
        %v157 = vld [vmem:[%s1 + $0xd0] sm:$0xff]
        %v158 = vld [vmem:[%s1 + $0xd8] sm:$0xff]
        %v159 = vld [vmem:[%s1 + $0xe0] sm:$0xff]
        %v160 = vld [vmem:[%s1 + $0xe8] sm:$0xff]
        %v161 = vld [vmem:[%s1 + $0xf0] sm:$0xff]
        %v162 = vld [vmem:[%s1 + $0xf8] sm:$0xff]
        %v163 = vld [vmem:[%s1 + $0x100] sm:$0xff]
        %v164 = vld [vmem:[%s1 + $0x108] sm:$0x1]
        %v165 = vld [vmem:[%s142] sm:$0xff]
        %v166 = vld [vmem:[%s142 + $0x8] sm:$0xff]
        %v167 = vld [vmem:[%s142 + $0x10] sm:$0xff]
        %v168 = vld [vmem:[%s142 + $0x18] sm:$0xff]
        %v169 = vld [vmem:[%s142 + $0x20] sm:$0xff]
        %v170 = vld [vmem:[%s142 + $0x28] sm:$0xff]
        %v171 = vld [vmem:[%s142 + $0x30] sm:$0xff]
        %v172 = vld [vmem:[%s142 + $0x38] sm:$0xff]
        %v173 = vld [vmem:[%s142 + $0x40] sm:$0xff]
        %v174 = vld [vmem:[%s142 + $0x48] sm:$0xff]
        %v175 = vld [vmem:[%s142 + $0x50] sm:$0xff]
        %v176 = vld [vmem:[%s142 + $0x58] sm:$0xff]
        %v177 = vld [vmem:[%s142 + $0x60] sm:$0xff]
        %v178 = vld [vmem:[%s142 + $0x68] sm:$0xff]
        %v179 = vld [vmem:[%s142 + $0x70] sm:$0xff]
        %v180 = vld [vmem:[%s142 + $0x78] sm:$0xff]
        %v181 = vlaneseq
        %v182 = vshrl.u32 %v181, 7
        %v183 = vsub.s32 0, %v182
        %v184 = vrot.slane %v147, %v183
        %vm185 = vcmask 89088
        %v187 = vsel %vm185, %v165, 0
        %v190 = vsel %vm185, %v166, 0
        %v193 = vsel %vm185, %v167, 0
        %v196 = vsel %vm185, %v168, 0
        %v199 = vsel %vm185, %v169, 0
        %v202 = vsel %vm185, %v170, 0
        %v205 = vsel %vm185, %v171, 0
        %v208 = vsel %vm185, %v172, 0
        %v211 = vsel %vm185, %v173, 0
        %v214 = vsel %vm185, %v174, 0
        %v217 = vsel %vm185, %v175, 0
        %v220 = vsel %vm185, %v176, 0
        %v223 = vsel %vm185, %v177, 0
        %v226 = vsel %vm185, %v178, 0
        %v229 = vsel %vm185, %v179, 0
        %v232 = vsel %vm185, %v180, 0
        %vm234 = vcmask 1042432
        %v236 = vsel %vm234, %v146, 0
        %238 = vmatprep.subr.mxu0 0.0
        %239 = vmatpush1.msra.mxu0 %v145
        %240 = vmatprep.subr.mxu0 0.0
        %241 = vmatpush1.msra.mxu0 %v236
        %242 = vmatprep.subr.mxu0 0.0
        %243 = vmatpush1.msra.mxu0 0.0
        %244 = vmatprep.subr.mxu0 0.0
        %245 = vmatpush1.msra.mxu0 0.0
        %246 = vmatprep.subr.mxu0 0.0
        %247 = vmatpush1.msra.mxu0 0.0
        %248 = vmatprep.subr.mxu0 0.0
        %249 = vmatpush1.msra.mxu0 0.0
        %250 = vmatprep.subr.mxu0 0.0
        %251 = vmatpush1.msra.mxu0 0.0
        %252 = vmatprep.subr.mxu0 0.0
        %253 = vmatpush1.msra.mxu0 0.0
        %254 = vmatprep.subr.mxu0 0.0
        %255 = vmatpush1.msra.mxu0 0.0
        %256 = vmatprep.subr.mxu0 0.0
        %257 = vmatpush1.msra.mxu0 0.0
        %258 = vmatprep.subr.mxu0 0.0
        %259 = vmatpush1.msra.mxu0 0.0
        %260 = vmatprep.subr.mxu0 0.0
        %261 = vmatpush1.msra.mxu0 0.0
        %262 = vmatprep.subr.mxu0 0.0
        %263 = vmatpush1.msra.mxu0 0.0
        %264 = vmatprep.subr.mxu0 0.0
        %265 = vmatpush1.msra.mxu0 0.0
        %266 = vmatprep.subr.mxu0 0.0
        %267 = vmatpush1.msra.mxu0 0.0
        %268 = vmatprep.subr.mxu0 0.0
        %269 = vmatpush1.msra.mxu0 0.0
        %270 = vmatprep.subr.mxu0 0.0
        %271 = vmatpush1.msra.mxu0 0.0
        %272 = vmatprep.subr.mxu0 0.0
        %273 = vmatpush1.msra.mxu0 0.0
        %274 = vmatprep.subr.mxu0 0.0
        %275 = vmatpush1.msra.mxu0 0.0
        %276 = vmatprep.subr.mxu0 0.0
        %277 = vmatpush1.msra.mxu0 0.0
        %278 = vmatprep.subr.mxu0 0.0
        %279 = vmatpush1.msra.mxu0 0.0
        %280 = vmatprep.subr.mxu0 0.0
        %281 = vmatpush1.msra.mxu0 0.0
        %282 = vmatprep.subr.mxu0 0.0
        %283 = vmatpush1.msra.mxu0 0.0
        %284 = vmatprep.subr.mxu0 0.0
        %285 = vmatpush1.msra.mxu0 0.0
        %286 = vmatprep.subr.mxu0 0.0
        %287 = vmatpush1.msra.mxu0 0.0
        %288 = vmatprep.subr.mxu0 0.0
        %289 = vmatpush1.msra.mxu0 0.0
        %290 = vmatprep.subr.mxu0 0.0
        %291 = vmatpush1.msra.mxu0 0.0
        %292 = vmatprep.subr.mxu0 0.0
        %293 = vmatpush1.msra.mxu0 0.0
        %294 = vmatprep.subr.mxu0 0.0
        %295 = vmatpush1.msra.mxu0 0.0
        %296 = vmatprep.subr.mxu0 0.0
        %297 = vmatpush1.msra.mxu0 0.0
        %298 = vmatprep.subr.mxu0 0.0
        %299 = vmatpush1.msra.mxu0 0.0
        %300 = vmatprep.subr.mxu0 0.0
        %301 = vmatpush1.msra.mxu0 0.0
        %302 = vmatprep.mubr.f32.mxu0 0.0
        %303 = vmatmul.mubr.f32.gmra.mrb[0].mxu0 %v187
        %v304 = vpop.f32.mrb[0].mxu0
        %v305 = vadd.f32 %v184, %v304
        %v306 = vpop.f32.mrb[0].mxu0
        %307 = vmatprep.mubr.f32.mxu0 0.0
        %308 = vmatmul.mubr.f32.gmra.mrb[0].mxu0 %v190
        %v309 = vpop.f32.mrb[0].mxu0
        %v310 = vadd.f32 %v184, %v309
        %v311 = vpop.f32.mrb[0].mxu0
        %312 = vmatprep.mubr.f32.mxu0 0.0
        %313 = vmatmul.mubr.f32.gmra.mrb[0].mxu0 %v193
        %v314 = vpop.f32.mrb[0].mxu0
        %v315 = vadd.f32 %v184, %v314
        %v316 = vpop.f32.mrb[0].mxu0
        %317 = vmatprep.mubr.f32.mxu0 0.0
        %318 = vmatmul.mubr.f32.gmra.mrb[0].mxu0 %v196
        %v319 = vpop.f32.mrb[0].mxu0
        %v320 = vadd.f32 %v184, %v319
        %v321 = vpop.f32.mrb[0].mxu0
        %322 = vmatprep.mubr.f32.mxu0 0.0
        %323 = vmatmul.mubr.f32.gmra.mrb[0].mxu0 %v199
        %v324 = vpop.f32.mrb[0].mxu0
        %v325 = vadd.f32 %v184, %v324
        %v326 = vpop.f32.mrb[0].mxu0
        %327 = vmatprep.mubr.f32.mxu0 0.0
        %328 = vmatmul.mubr.f32.gmra.mrb[0].mxu0 %v202
        %v329 = vpop.f32.mrb[0].mxu0
        %v330 = vadd.f32 %v184, %v329
        %v331 = vpop.f32.mrb[0].mxu0
        %332 = vmatprep.mubr.f32.mxu0 0.0
        %333 = vmatmul.mubr.f32.gmra.mrb[0].mxu0 %v205
        %v334 = vpop.f32.mrb[0].mxu0
        %v335 = vadd.f32 %v184, %v334
        %v336 = vpop.f32.mrb[0].mxu0
        %337 = vmatprep.mubr.f32.mxu0 0.0
        %338 = vmatmul.mubr.f32.gmra.mrb[0].mxu0 %v208
        %v339 = vpop.f32.mrb[0].mxu0
        %v340 = vadd.f32 %v184, %v339
        %v341 = vpop.f32.mrb[0].mxu0
        %342 = vmatprep.mubr.f32.mxu0 0.0
        %343 = vmatmul.mubr.f32.gmra.mrb[0].mxu0 %v211
        %v344 = vpop.f32.mrb[0].mxu0
        %v345 = vadd.f32 %v184, %v344
        %v346 = vpop.f32.mrb[0].mxu0
        %347 = vmatprep.mubr.f32.mxu0 0.0
        %348 = vmatmul.mubr.f32.gmra.mrb[0].mxu0 %v214
        %v349 = vpop.f32.mrb[0].mxu0
        %v350 = vadd.f32 %v184, %v349
        %v351 = vpop.f32.mrb[0].mxu0
        %352 = vmatprep.mubr.f32.mxu0 0.0
        %353 = vmatmul.mubr.f32.gmra.mrb[0].mxu0 %v217
        %v354 = vpop.f32.mrb[0].mxu0
        %v355 = vadd.f32 %v184, %v354
        %v356 = vpop.f32.mrb[0].mxu0
        %357 = vmatprep.mubr.f32.mxu0 0.0
        %358 = vmatmul.mubr.f32.gmra.mrb[0].mxu0 %v220
        %v359 = vpop.f32.mrb[0].mxu0
        %v360 = vadd.f32 %v184, %v359
        %v361 = vpop.f32.mrb[0].mxu0
        %362 = vmatprep.mubr.f32.mxu0 0.0
        %363 = vmatmul.mubr.f32.gmra.mrb[0].mxu0 %v223
        %v364 = vpop.f32.mrb[0].mxu0
        %v365 = vadd.f32 %v184, %v364
        %v366 = vpop.f32.mrb[0].mxu0
        %367 = vmatprep.mubr.f32.mxu0 0.0
        %368 = vmatmul.mubr.f32.gmra.mrb[0].mxu0 %v226
        %v369 = vpop.f32.mrb[0].mxu0
        %v370 = vadd.f32 %v184, %v369
        %v371 = vpop.f32.mrb[0].mxu0
        %372 = vmatprep.mubr.f32.mxu0 0.0
        %373 = vmatmul.mubr.f32.gmra.mrb[0].mxu0 %v229
        %v374 = vpop.f32.mrb[0].mxu0
        %v375 = vadd.f32 %v184, %v374
        %v376 = vpop.f32.mrb[0].mxu0
        %377 = vmatprep.mubr.f32.mxu0 0.0
        %378 = vmatmul.mubr.f32.gmra.mrb[0].mxu0 %v232
        %v379 = vpop.f32.mrb[0].mxu0
        %v380 = vadd.f32 %v184, %v379
        %v381 = vpop.f32.mrb[0].mxu0
        %382 = vdwg.mxu0
        %v383 = vmax.f32 %v305, 0.0
        %v384 = vmax.f32 %v310, 0.0
        %v385 = vmax.f32 %v315, 0.0
        %v386 = vmax.f32 %v320, 0.0
        %v387 = vmax.f32 %v325, 0.0
        %v388 = vmax.f32 %v330, 0.0
        %v389 = vmax.f32 %v335, 0.0
        %v390 = vmax.f32 %v340, 0.0
        %v391 = vmax.f32 %v345, 0.0
        %v392 = vmax.f32 %v350, 0.0
        %v393 = vmax.f32 %v355, 0.0
        %v394 = vmax.f32 %v360, 0.0
        %v395 = vmax.f32 %v365, 0.0
        %v396 = vmax.f32 %v370, 0.0
        %v397 = vmax.f32 %v375, 0.0
        %v398 = vmax.f32 %v380, 0.0
        %v399 = vlaneseq
        %v400 = vshrl.u32 %v399, 7
        %v401 = vsub.s32 0, %v400
        %v402 = vrot.slane %v164, %v401
        %403 = vmatprep.subr.mxu0 0.0
        %404 = vmatpush1.msra.mxu0 %v148
        %405 = vmatprep.subr.mxu0 0.0
        %406 = vmatpush1.msra.mxu0 %v149
        %407 = vmatprep.subr.mxu0 0.0
        %408 = vmatpush1.msra.mxu0 %v150
        %409 = vmatprep.subr.mxu0 0.0
        %410 = vmatpush1.msra.mxu0 %v151
        %411 = vmatprep.subr.mxu0 0.0
        %412 = vmatpush1.msra.mxu0 %v152
        %413 = vmatprep.subr.mxu0 0.0
        %414 = vmatpush1.msra.mxu0 %v153
        %415 = vmatprep.subr.mxu0 0.0
        %416 = vmatpush1.msra.mxu0 %v154
        %417 = vmatprep.subr.mxu0 0.0
        %418 = vmatpush1.msra.mxu0 %v155
        %419 = vmatprep.subr.mxu0 0.0
        %420 = vmatpush1.msra.mxu0 %v156
        %421 = vmatprep.subr.mxu0 0.0
        %422 = vmatpush1.msra.mxu0 %v157
        %423 = vmatprep.subr.mxu0 0.0
        %424 = vmatpush1.msra.mxu0 %v158
        %425 = vmatprep.subr.mxu0 0.0
        %426 = vmatpush1.msra.mxu0 %v159
        %427 = vmatprep.subr.mxu0 0.0
        %428 = vmatpush1.msra.mxu0 %v160
        %429 = vmatprep.subr.mxu0 0.0
        %430 = vmatpush1.msra.mxu0 %v161
        %431 = vmatprep.subr.mxu0 0.0
        %432 = vmatpush1.msra.mxu0 %v162
        %433 = vmatprep.subr.mxu0 0.0
        %434 = vmatpush1.msra.mxu0 %v163
        %435 = vmatprep.subr.mxu0 0.0
        %436 = vmatpush1.msra.mxu0 0.0
        %437 = vmatprep.subr.mxu0 0.0
        %438 = vmatpush1.msra.mxu0 0.0
        %439 = vmatprep.subr.mxu0 0.0
        %440 = vmatpush1.msra.mxu0 0.0
        %441 = vmatprep.subr.mxu0 0.0
        %442 = vmatpush1.msra.mxu0 0.0
        %443 = vmatprep.subr.mxu0 0.0
        %444 = vmatpush1.msra.mxu0 0.0
        %445 = vmatprep.subr.mxu0 0.0
        %446 = vmatpush1.msra.mxu0 0.0
        %447 = vmatprep.subr.mxu0 0.0
        %448 = vmatpush1.msra.mxu0 0.0
        %449 = vmatprep.subr.mxu0 0.0
        %450 = vmatpush1.msra.mxu0 0.0
        %451 = vmatprep.subr.mxu0 0.0
        %452 = vmatpush1.msra.mxu0 0.0
        %453 = vmatprep.subr.mxu0 0.0
        %454 = vmatpush1.msra.mxu0 0.0
        %455 = vmatprep.subr.mxu0 0.0
        %456 = vmatpush1.msra.mxu0 0.0
        %457 = vmatprep.subr.mxu0 0.0
        %458 = vmatpush1.msra.mxu0 0.0
        %459 = vmatprep.subr.mxu0 0.0
        %460 = vmatpush1.msra.mxu0 0.0
        %461 = vmatprep.subr.mxu0 0.0
        %462 = vmatpush1.msra.mxu0 0.0
        %463 = vmatprep.subr.mxu0 0.0
        %464 = vmatpush1.msra.mxu0 0.0
        %465 = vmatprep.subr.mxu0 0.0
        %466 = vmatpush1.msra.mxu0 0.0
        %467 = vmatprep.mubr.f32.mxu0 0.0
        %468 = vmatmul.mubr.f32.gmra.mrb[0].mxu0 %v383
        %v469 = vpop.f32.mrb[0].mxu0
        %v470 = vadd.f32 %v402, %v469
        %v471 = vpop.f32.mrb[0].mxu0
        %472 = vmatprep.mubr.f32.mxu0 0.0
        %473 = vmatmul.mubr.f32.gmra.mrb[0].mxu0 %v384
        %v474 = vpop.f32.mrb[0].mxu0
        %v475 = vadd.f32 %v402, %v474
        %v476 = vpop.f32.mrb[0].mxu0
        %477 = vmatprep.mubr.f32.mxu0 0.0
        %478 = vmatmul.mubr.f32.gmra.mrb[0].mxu0 %v385
        %v479 = vpop.f32.mrb[0].mxu0
        %v480 = vadd.f32 %v402, %v479
        %v481 = vpop.f32.mrb[0].mxu0
        %482 = vmatprep.mubr.f32.mxu0 0.0
        %483 = vmatmul.mubr.f32.gmra.mrb[0].mxu0 %v386
        %v484 = vpop.f32.mrb[0].mxu0
        %v485 = vadd.f32 %v402, %v484
        %v486 = vpop.f32.mrb[0].mxu0
        %487 = vmatprep.mubr.f32.mxu0 0.0
        %488 = vmatmul.mubr.f32.gmra.mrb[0].mxu0 %v387
        %v489 = vpop.f32.mrb[0].mxu0
        %v490 = vadd.f32 %v402, %v489
        %v491 = vpop.f32.mrb[0].mxu0
        %492 = vmatprep.mubr.f32.mxu0 0.0
        %493 = vmatmul.mubr.f32.gmra.mrb[0].mxu0 %v388
        %v494 = vpop.f32.mrb[0].mxu0
        %v495 = vadd.f32 %v402, %v494
        %v496 = vpop.f32.mrb[0].mxu0
        %497 = vmatprep.mubr.f32.mxu0 0.0
        %498 = vmatmul.mubr.f32.gmra.mrb[0].mxu0 %v389
        %v499 = vpop.f32.mrb[0].mxu0
        %v500 = vadd.f32 %v402, %v499
        %v501 = vpop.f32.mrb[0].mxu0
        %502 = vmatprep.mubr.f32.mxu0 0.0
        %503 = vmatmul.mubr.f32.gmra.mrb[0].mxu0 %v390
        %v504 = vpop.f32.mrb[0].mxu0
        %v505 = vadd.f32 %v402, %v504
        %v506 = vpop.f32.mrb[0].mxu0
        %507 = vmatprep.mubr.f32.mxu0 0.0
        %508 = vmatmul.mubr.f32.gmra.mrb[0].mxu0 %v391
        %v509 = vpop.f32.mrb[0].mxu0
        %v510 = vadd.f32 %v402, %v509
        %v511 = vpop.f32.mrb[0].mxu0
        %512 = vmatprep.mubr.f32.mxu0 0.0
        %513 = vmatmul.mubr.f32.gmra.mrb[0].mxu0 %v392
        %v514 = vpop.f32.mrb[0].mxu0
        %v515 = vadd.f32 %v402, %v514
        %v516 = vpop.f32.mrb[0].mxu0
        %517 = vmatprep.mubr.f32.mxu0 0.0
        %518 = vmatmul.mubr.f32.gmra.mrb[0].mxu0 %v393
        %v519 = vpop.f32.mrb[0].mxu0
        %v520 = vadd.f32 %v402, %v519
        %v521 = vpop.f32.mrb[0].mxu0
        %522 = vmatprep.mubr.f32.mxu0 0.0
        %523 = vmatmul.mubr.f32.gmra.mrb[0].mxu0 %v394
        %v524 = vpop.f32.mrb[0].mxu0
        %v525 = vadd.f32 %v402, %v524
        %v526 = vpop.f32.mrb[0].mxu0
        %527 = vmatprep.mubr.f32.mxu0 0.0
        %528 = vmatmul.mubr.f32.gmra.mrb[0].mxu0 %v395
        %v529 = vpop.f32.mrb[0].mxu0
        %v530 = vadd.f32 %v402, %v529
        %v531 = vpop.f32.mrb[0].mxu0
        %532 = vmatprep.mubr.f32.mxu0 0.0
        %533 = vmatmul.mubr.f32.gmra.mrb[0].mxu0 %v396
        %v534 = vpop.f32.mrb[0].mxu0
        %v535 = vadd.f32 %v402, %v534
        %v536 = vpop.f32.mrb[0].mxu0
        %537 = vmatprep.mubr.f32.mxu0 0.0
        %538 = vmatmul.mubr.f32.gmra.mrb[0].mxu0 %v397
        %v539 = vpop.f32.mrb[0].mxu0
        %v540 = vadd.f32 %v402, %v539
        %v541 = vpop.f32.mrb[0].mxu0
        %542 = vmatprep.mubr.f32.mxu0 0.0
        %543 = vmatmul.mubr.f32.gmra.mrb[0].mxu0 %v398
        %v544 = vpop.f32.mrb[0].mxu0
        %v545 = vadd.f32 %v402, %v544
        %v546 = vpop.f32.mrb[0].mxu0
        %547 = vdwg.mxu0
        %548 = vst [vmem:[%s137] sm:$0xff] %v470
        %549 = vst [vmem:[%s137 + $0x8] sm:$0xff] %v475
        %550 = vst [vmem:[%s137 + $0x10] sm:$0xff] %v480
        %551 = vst [vmem:[%s137 + $0x18] sm:$0xff] %v485
        %552 = vst [vmem:[%s137 + $0x20] sm:$0xff] %v490
        %553 = vst [vmem:[%s137 + $0x28] sm:$0xff] %v495
        %554 = vst [vmem:[%s137 + $0x30] sm:$0xff] %v500
        %555 = vst [vmem:[%s137 + $0x38] sm:$0xff] %v505
        %556 = vst [vmem:[%s137 + $0x40] sm:$0xff] %v510
        %557 = vst [vmem:[%s137 + $0x48] sm:$0xff] %v515
        %558 = vst [vmem:[%s137 + $0x50] sm:$0xff] %v520
        %559 = vst [vmem:[%s137 + $0x58] sm:$0xff] %v525
        %560 = vst [vmem:[%s137 + $0x60] sm:$0xff] %v530
        %561 = vst [vmem:[%s137 + $0x68] sm:$0xff] %v535
        %562 = vst [vmem:[%s137 + $0x70] sm:$0xff] %v540
        %563 = vst [vmem:[%s137 + $0x78] sm:$0xff] %v545
        %s564 = sand.u32 %s71, 1
        %s565 = scalar_lea.sflag [#allocation3], %s564
        %s566 = sand.u32 %s71, 1
        %s567 = smul.addr %s566, 128
        %s568 = scalar_lea.vmem [#allocation2], %s567
        // Predicated region
        $region29: #{tpu_custom_call.1} parent=27 // pred_check
          %p569 = pneg %p81
        $region30: #{tpu_custom_call.1} parent=27 // pred_check_branch
          %571 = sbr.rel (%p569) target = $region32
        $region31: #{tpu_custom_call.1} parent=27 // pred_region
          %s572 = smul.u32 16, %s16
          %s574 = ssub.s32 2048, 2048
          %575 = vsyncadd %s565, %s574
          %s576 = smul.addr %s572, 128
          %s577 = scalar_lea.hbm %s2, %s576
          %s578 = sshll.u32 %s568, 4
          %s579 = int_to_ptr.vmem [resolvable:$true] %s578
          %584 = dma.vmem_to_hbm [thread:$0]  %s579, 2048, %s577, %s565, 128, 128, 8
        $region32: #{tpu_custom_call.1} parent=27 // pred_fallthru
          _
      $region28: #{tpu_custom_call.1} parent=5 // pred_fallthru
        _
      %p585 = scmp.le.s32.totalorder 2, %s11
      // Predicated region
      $region33: #{tpu_custom_call.1} parent=5 // pred_check
        %p586 = pneg %p585
      $region34: #{tpu_custom_call.1} parent=5 // pred_check_branch
        %588 = sbr.rel (%p586) target = $region36
      $region35: #{tpu_custom_call.1} parent=5 // pred_region
        %s589 = ssub.s32 %s11, 2
        // Predicated region
        $region37: #{tpu_custom_call.1} parent=35 // pred_check
          %p590 = pneg %p87
        $region38: #{tpu_custom_call.1} parent=35 // pred_check_branch
          %592 = sbr.rel (%p590) target = $region40
        $region39: #{tpu_custom_call.1} parent=35 // pred_region
          %s593 = sand.u32 %s72, 1
          %s594 = scalar_lea.sflag [#allocation3], %s593
          %s595 = sand.u32 %s72, 1
          %s596 = smul.addr %s595, 128
          %s597 = scalar_lea.vmem [#allocation2], %s596
          %598 = dma.done %s594, 2048
        $region40: #{tpu_custom_call.1} parent=35 // pred_fallthru
          _
      $region36: #{tpu_custom_call.1} parent=5 // pred_fallthru
        _
    $region6: #{tpu_custom_call.1} parent=1 // loop_footer
      %s15 = sadd.s32 1, %s11
    $region7: #{tpu_custom_call.1} parent=1 // loop_footer_branch
      %10 = sbr.rel target = $region3
    $region8: #{tpu_custom_call.1} parent=1 // loop_exit
      _
    %599 = vsyncpa [#allocation3], 1
    %s600 = scalar_lea.sflag [#allocation3], 1
    %601 = vsyncpa %s600, 1

</llo_original>
